<compile_context>
chip_gen: v5e
topology: v5e:2x2
jax: 0.10.0
libtpu: 0.0.40
codegen_flags: <defaults>
</compile_context>

<pallas_src>
import jax
import jax.numpy as jnp
from jax.experimental import pallas as pl
from jax.experimental.pallas import tpu as pltpu


# ---------------------------------------------------------------------------
# Config helpers (mirror ActivityEmb.__init__)
# ---------------------------------------------------------------------------
def bin_times_to_frames(bin_times, frame_hz):
    return [int(bt * frame_hz) for bt in bin_times]


def _round_up(x: int, m: int) -> int:
    return ((x + m - 1) // m) * m


SAMPLES_PER_ROW = 128          # samples packed per lane-dense row (output lane width)


# ---------------------------------------------------------------------------
# Pallas kernel: nearest-binary-code index via per-bit decode + block-diag MXU reduce
#   x_ref   : (tile_rows, 128*D)  activity, 128 samples per row, D bits per sample
#   w_ref   : (128*D, 128)        block-diagonal powers-of-two weight (bf16)
#   out_ref : (tile_rows, 128)    int32 class index, lane-dense
# ---------------------------------------------------------------------------
def onehot_to_idx_kernel(x_ref, w_ref, out_ref):
    # strict '>' keeps ties on bit 0 -> same result as torch's first-maximum
    bits = (x_ref[...] > 0.5).astype(w_ref.dtype)          # exact 0/1 in bf16
    # idx[r, s] = sum_j bits[r, s*D + j] * 2**j ; exact in f32 accumulation
    idx = jnp.dot(bits, w_ref[...], preferred_element_type=jnp.float32)
    out_ref[...] = idx.astype(out_ref.dtype)


def activity_emb_forward(projection_window: jnp.ndarray,
                         block_rows: int = 512) -> jnp.ndarray:
    """projection_window: (..., 2, n_bins) -> class indices (...,) int32."""
    n_bins = projection_window.shape[-1]
    assert projection_window.shape[-2] == 2
    D = 2 * n_bins                               # total_bins (8 for default config)
    lead_shape = projection_window.shape[:-2]
    C = SAMPLES_PER_ROW * D                      # lane width of one packed row

    # (..., 2, n_bins) -> (N, D): speaker-0 bins then speaker-1 bins, LSB-first.
    flat = projection_window.reshape(-1, D)      # keep input dtype (single HBM read)
    N = flat.shape[0]

    # Pad samples to a multiple of 128 only when needed (rare ragged tail).
    n_pad = _round_up(max(N, 1), SAMPLES_PER_ROW)
    if n_pad != N:
        flat = jnp.pad(flat, ((0, n_pad - N), (0, 0)))
    R = n_pad // SAMPLES_PER_ROW
    x2d = flat.reshape(R, C)                     # free contiguous reshape, lane-dense

    # Tile rows: ~2 MiB f32 input block per step; ragged last block handled by grid.
    tile_rows = min(block_rows, R)
    if R >= 16 and tile_rows == R:
        # split into >=2 grid steps so the parallel axis can use both v7x TCs
        tile_rows = _round_up(pl.cdiv(R, 2), 8)
    num_tiles = pl.cdiv(R, tile_rows)

    # Constant block-diagonal powers-of-two weight: W[s*D + j, s] = 2**j (exact bf16).
    pow2 = (2.0 ** jnp.arange(D, dtype=jnp.float32)).astype(jnp.bfloat16)   # (D,)
    eye = jnp.eye(SAMPLES_PER_ROW, dtype=jnp.bfloat16)                      # (128,128)
    W = (eye[:, None, :] * pow2[None, :, None]).reshape(C, SAMPLES_PER_ROW)

    out = pl.pallas_call(
        onehot_to_idx_kernel,
        out_shape=jax.ShapeDtypeStruct((R, SAMPLES_PER_ROW), jnp.int32),
        grid=(num_tiles,),
        in_specs=[
            pl.BlockSpec((tile_rows, C), lambda i: (i, 0)),
            pl.BlockSpec((C, SAMPLES_PER_ROW), lambda i: (0, 0)),  # resident constant
        ],
        out_specs=pl.BlockSpec((tile_rows, SAMPLES_PER_ROW), lambda i: (i, 0)),
        compiler_params=pltpu.CompilerParams(
            dimension_semantics=("parallel",)),
    )(x2d, W)

    idx = out.reshape(-1)
    if n_pad != N:                               # skip the slice in the clean case
        idx = idx[:N]
    return idx.reshape(lead_shape)


# ---------------------------------------------------------------------------
if __name__ == "__main__":
    # ActivityEmb(bin_times=[0.2, 0.4, 0.6, 0.8], frame_hz=100)
    bin_times = [0.2, 0.4, 0.6, 0.8]
    frame_hz = 100
    bin_frames = bin_times_to_frames(bin_times, frame_hz)
    n_bins = len(bin_frames)          # 4
    total_bins = 2 * n_bins           # 8
    n_classes = 2 ** total_bins       # 256

    # Small deterministic binary projection window: (batch=2, seq=8, 2, 4)
    key = jax.random.PRNGKey(0)
    projection_window = jax.random.bernoulli(
        key, p=0.5, shape=(2, 8, 2, n_bins)
    ).astype(jnp.float32)

    idx = activity_emb_forward(projection_window)
    idx = jax.block_until_ready(idx)

    # reference: nearest binary code of a binary vector == its LSB-first decimal value
    bits = projection_window.reshape(-1, total_bins).astype(jnp.int32)
    expected = jnp.sum(bits * (2 ** jnp.arange(total_bins, dtype=jnp.int32)), axis=-1)
    expected = expected.reshape(projection_window.shape[:-2])
    assert idx.shape == projection_window.shape[:-2]
    assert idx.dtype == jnp.int32
    assert bool(jnp.all(idx == expected))

    print("KERNEL_OK")
</pallas_src>

<mosaic_0001>
module attributes {stable_mosaic.version = 11 : i64} {
  func.func @onehot_to_idx_kernel(%arg0: i32, %arg1: memref<1x1024xf32, #tpu.memory_space<vmem>>, %arg2: memref<1024x128xbf16, #tpu.memory_space<vmem>>, %arg3: memref<1x128xi32, #tpu.memory_space<vmem>>) attributes {dimension_semantics = [#tpu.dimension_semantics<parallel>], iteration_bounds = array<i64: 1>, scalar_prefetch = 0 : i64, scratch_operands = 0 : i64, tpu.core_type = #tpu.core_type<tc>, window_params = [{transform_indices = @transform_0, window_bounds = array<i64: 1, 1024>}, {pipeline_mode = #tpu.pipeline_mode<synchronous>, transform_indices = @transform_1, window_bounds = array<i64: 1024, 128>}, {transform_indices = @transform_2, window_bounds = array<i64: 1, 128>}]} {
    %c0 = arith.constant 0 : index
    %c0_0 = arith.constant 0 : index
    %0 = vector.load %arg1[%c0, %c0_0] : memref<1x1024xf32, #tpu.memory_space<vmem>>, vector<1x1024xf32>
    %cst = arith.constant 5.000000e-01 : f32
    %1 = vector.broadcast %cst : f32 to vector<1x1024xf32>
    %2 = arith.cmpf ogt, %0, %1 : vector<1x1024xf32>
    %3 = arith.extui %2 : vector<1x1024xi1> to vector<1x1024xi32>
    %4 = arith.sitofp %3 : vector<1x1024xi32> to vector<1x1024xf32>
    %5 = arith.truncf %4 : vector<1x1024xf32> to vector<1x1024xbf16>
    %c0_1 = arith.constant 0 : index
    %c0_2 = arith.constant 0 : index
    %6 = vector.load %arg2[%c0_1, %c0_2] : memref<1024x128xbf16, #tpu.memory_space<vmem>>, vector<1024x128xbf16>
    %cst_3 = arith.constant dense<0.000000e+00> : vector<1x128xf32>
    %7 = tpu.matmul %5, %6, %cst_3 {dimension_numbers = #tpu.dot_dimension_numbers<[1], [0], [0], [1], [0, 0, 1, 1], [], []>} : vector<1x1024xbf16>, vector<1024x128xbf16>, vector<1x128xf32> -> vector<1x128xf32>
    %8 = arith.fptosi %7 : vector<1x128xf32> to vector<1x128xi32>
    %c0_4 = arith.constant 0 : index
    %c0_5 = arith.constant 0 : index
    %9 = vector.load %arg3[%c0_4, %c0_5] : memref<1x128xi32, #tpu.memory_space<vmem>>, vector<1x128xi32>
    tpu.vector_store %arg3[%c0_4, %c0_5], %8 {strides = array<i32>} : memref<1x128xi32, #tpu.memory_space<vmem>>, vector<1x128xi32>,
    return
  }
  func.func @transform_0(%arg0: i32) -> (i32, i32) {
    %c0_i32 = arith.constant 0 : i32
    %c0_i32_0 = arith.constant 0 : i32
    return %arg0, %c0_i32 : i32, i32
  }
  func.func @transform_1(%arg0: i32) -> (i32, i32) {
    %c0_i32 = arith.constant 0 : i32
    %c0_i32_0 = arith.constant 0 : i32
    %c0_i32_1 = arith.constant 0 : i32
    return %c0_i32, %c0_i32_0 : i32, i32
  }
  func.func @transform_2(%arg0: i32) -> (i32, i32) {
    %c0_i32 = arith.constant 0 : i32
    %c0_i32_0 = arith.constant 0 : i32
    return %arg0, %c0_i32 : i32, i32
  }
}

</mosaic_0001>

<llo_original>
// kernel: tpu_custom_call.1
$region0: #{tpu_custom_call.1}
  #allocation0 [shape = 'u32[]', space=smem, size = 0x4, offset = 0x4, fixed_abs, tag = 'smem constant byte address 0x4 - core index']
  #allocation1 [shape = 'u32[72,128]{1,0:T(1,128)}', space=vmem, size = 0x9000, scoped, tag = 'internal scratch']
  %s0 = inlined_call_operand.hbm [shape: f32[1,1024], index: 0, kind: input, shape index: {}]
  %s1 = inlined_call_operand.hbm [shape: bf16[1024,128], index: 1, kind: input, shape index: {}]
  %s2 = inlined_call_operand.hbm [shape: s32[1,128], index: 2, kind: output, shape index: {}]
  %s3 = sld [smem:[#allocation0]]
  $region26: #{tpu_custom_call.1} parent=0
    _
  %s5 = ssub.s32 1, %s3
  %s6 = scalar_select 0, %s5, %s3
  $region1: #{tpu_custom_call.1} parent=0
    #allocation2 [shape = 'u8[4096]{0}', space=vmem, size = 0x1000, scoped, tag = 'input window, operand 0, single buffered']
    #allocation3 [shape = 's32[1]{0}', space=sflag, size = 0x4, scoped, tag = 'scoped memory for tpu_custom_call.1']
    #allocation4 [shape = 's32[1]{0}', space=sflag, size = 0x4, scoped, tag = 'scoped memory for tpu_custom_call.1']
    #allocation5 [shape = 'u8[262144]{0}', space=vmem, size = 0x40000, scoped, tag = 'input window, operand 1, single buffered']
    #allocation6 [shape = 's32[1]{0}', space=sflag, size = 0x4, scoped, tag = 'scoped memory for tpu_custom_call.1']
    #allocation7 [shape = 'u8[512]{0}', space=vmem, size = 0x400, scoped, tag = 'output window, operand 0, single buffered']
    %7 = vsyncpa [#allocation3], 0
    %8 = vsyncpa [#allocation6], 0
    %9 = vsyncpa [#allocation4], 0
    // Predicated region
    $region2: #{tpu_custom_call.1} parent=1 // pred_check
      _
    $region3: #{tpu_custom_call.1} parent=1 // pred_check_branch
      %11 = sbr.rel (0) target = $region5
    $region4: #{tpu_custom_call.1} parent=1 // pred_region
      %13 = vsyncadd [#allocation3], 0
      %s15 = sshll.u32 %s0, 4
      %s16 = int_to_ptr.hbm [resolvable:$true] %s15
      %s17 = sshll.u32 [#allocation2], 4
      %s18 = int_to_ptr.vmem [resolvable:$true] %s17
      %20 = dma.hbm_to_vmem [thread:$0]  %s16, 128, %s18, [#allocation3]
    $region5: #{tpu_custom_call.1} parent=1 // pred_fallthru
      _
    // Predicated region
    $region6: #{tpu_custom_call.1} parent=1 // pred_check
      _
    $region7: #{tpu_custom_call.1} parent=1 // pred_check_branch
      %22 = sbr.rel (0) target = $region9
    $region8: #{tpu_custom_call.1} parent=1 // pred_region
      %24 = vsyncadd [#allocation6], 0
      %s25 = sshll.u32 %s1, 4
      %s26 = int_to_ptr.hbm [resolvable:$true] %s25
      %s27 = sshll.u32 [#allocation5], 4
      %s28 = int_to_ptr.vmem [resolvable:$true] %s27
      %33 = dma.hbm_to_vmem [thread:$0]  %s26, 8192, %s28, [#allocation6], 64, 64, 4
    $region9: #{tpu_custom_call.1} parent=1 // pred_fallthru
      _
    // Predicated region
    $region10: #{tpu_custom_call.1} parent=1 // pred_check
      _
    $region11: #{tpu_custom_call.1} parent=1 // pred_check_branch
      %35 = sbr.rel (0) target = $region13
    $region12: #{tpu_custom_call.1} parent=1 // pred_region
      %37 = dma.done [#allocation3], 128
    $region13: #{tpu_custom_call.1} parent=1 // pred_fallthru
      _
    // Predicated region
    $region14: #{tpu_custom_call.1} parent=1 // pred_check
      _
    $region15: #{tpu_custom_call.1} parent=1 // pred_check_branch
      %39 = sbr.rel (0) target = $region17
    $region16: #{tpu_custom_call.1} parent=1 // pred_region
      %41 = dma.done [#allocation6], 8192
    $region17: #{tpu_custom_call.1} parent=1 // pred_fallthru
      _
    %v42 = vld [vmem:[#allocation2] sm:$0xff]
    %vm43 = vcmp.gt.f32.partialorder %v42, 0.5
    %v44 = vsel %vm43, 1, 0
    %v45 = vcvt.s32.f32 %v44
    %v47 = vperm.slane %v45, 0
    %v48 = vperm.slane %v45, 1
    %v49 = vperm.slane %v45, 2
    %v50 = vperm.slane %v45, 3
    %v51 = vperm.slane %v45, 4
    %v52 = vperm.slane %v45, 5
    %v53 = vperm.slane %v45, 6
    %v54 = vperm.slane %v45, 7
    %v63 = vpack.c.bf16 %v47, %v47
    %v64 = vpack.c.bf16 %v48, %v48
    %v65 = vpack.c.bf16 %v49, %v49
    %v66 = vpack.c.bf16 %v50, %v50
    %v67 = vpack.c.bf16 %v51, %v51
    %v68 = vpack.c.bf16 %v52, %v52
    %v69 = vpack.c.bf16 %v53, %v53
    %v70 = vpack.c.bf16 %v54, %v54
    %v71 = vld [vmem:[#allocation5] sm:$0xf]
    %v72 = vld [vmem:[#allocation5 + $0x4] sm:$0xf]
    %v73 = vld [vmem:[#allocation5 + $0x8] sm:$0xf]
    %v74 = vld [vmem:[#allocation5 + $0xc] sm:$0xf]
    %v75 = vld [vmem:[#allocation5 + $0x10] sm:$0xf]
    %v76 = vld [vmem:[#allocation5 + $0x14] sm:$0xf]
    %v77 = vld [vmem:[#allocation5 + $0x18] sm:$0xf]
    %v78 = vld [vmem:[#allocation5 + $0x1c] sm:$0xf]
    %v79 = vld [vmem:[#allocation5 + $0x20] sm:$0xf]
    %v80 = vld [vmem:[#allocation5 + $0x24] sm:$0xf]
    %v81 = vld [vmem:[#allocation5 + $0x28] sm:$0xf]
    %v82 = vld [vmem:[#allocation5 + $0x2c] sm:$0xf]
    %v83 = vld [vmem:[#allocation5 + $0x30] sm:$0xf]
    %v84 = vld [vmem:[#allocation5 + $0x34] sm:$0xf]
    %v85 = vld [vmem:[#allocation5 + $0x38] sm:$0xf]
    %v86 = vld [vmem:[#allocation5 + $0x3c] sm:$0xf]
    %v87 = vld [vmem:[#allocation5 + $0x40] sm:$0xf]
    %v88 = vld [vmem:[#allocation5 + $0x44] sm:$0xf]
    %v89 = vld [vmem:[#allocation5 + $0x48] sm:$0xf]
    %v90 = vld [vmem:[#allocation5 + $0x4c] sm:$0xf]
    %v91 = vld [vmem:[#allocation5 + $0x50] sm:$0xf]
    %v92 = vld [vmem:[#allocation5 + $0x54] sm:$0xf]
    %v93 = vld [vmem:[#allocation5 + $0x58] sm:$0xf]
    %v94 = vld [vmem:[#allocation5 + $0x5c] sm:$0xf]
    %v95 = vld [vmem:[#allocation5 + $0x60] sm:$0xf]
    %v96 = vld [vmem:[#allocation5 + $0x64] sm:$0xf]
    %v97 = vld [vmem:[#allocation5 + $0x68] sm:$0xf]
    %v98 = vld [vmem:[#allocation5 + $0x6c] sm:$0xf]
    %v99 = vld [vmem:[#allocation5 + $0x70] sm:$0xf]
    %v100 = vld [vmem:[#allocation5 + $0x74] sm:$0xf]
    %v101 = vld [vmem:[#allocation5 + $0x78] sm:$0xf]
    %v102 = vld [vmem:[#allocation5 + $0x7c] sm:$0xf]
    %v103 = vld [vmem:[#allocation5 + $0x80] sm:$0xf]
    %v104 = vld [vmem:[#allocation5 + $0x84] sm:$0xf]
    %v105 = vld [vmem:[#allocation5 + $0x88] sm:$0xf]
    %v106 = vld [vmem:[#allocation5 + $0x8c] sm:$0xf]
    %v107 = vld [vmem:[#allocation5 + $0x90] sm:$0xf]
    %v108 = vld [vmem:[#allocation5 + $0x94] sm:$0xf]
    %v109 = vld [vmem:[#allocation5 + $0x98] sm:$0xf]
    %v110 = vld [vmem:[#allocation5 + $0x9c] sm:$0xf]
    %v111 = vld [vmem:[#allocation5 + $0xa0] sm:$0xf]
    %v112 = vld [vmem:[#allocation5 + $0xa4] sm:$0xf]
    %v113 = vld [vmem:[#allocation5 + $0xa8] sm:$0xf]
    %v114 = vld [vmem:[#allocation5 + $0xac] sm:$0xf]
    %v115 = vld [vmem:[#allocation5 + $0xb0] sm:$0xf]
    %v116 = vld [vmem:[#allocation5 + $0xb4] sm:$0xf]
    %v117 = vld [vmem:[#allocation5 + $0xb8] sm:$0xf]
    %v118 = vld [vmem:[#allocation5 + $0xbc] sm:$0xf]
    %v119 = vld [vmem:[#allocation5 + $0xc0] sm:$0xf]
    %v120 = vld [vmem:[#allocation5 + $0xc4] sm:$0xf]
    %v121 = vld [vmem:[#allocation5 + $0xc8] sm:$0xf]
    %v122 = vld [vmem:[#allocation5 + $0xcc] sm:$0xf]
    %v123 = vld [vmem:[#allocation5 + $0xd0] sm:$0xf]
    %v124 = vld [vmem:[#allocation5 + $0xd4] sm:$0xf]
    %v125 = vld [vmem:[#allocation5 + $0xd8] sm:$0xf]
    %v126 = vld [vmem:[#allocation5 + $0xdc] sm:$0xf]
    %v127 = vld [vmem:[#allocation5 + $0xe0] sm:$0xf]
    %v128 = vld [vmem:[#allocation5 + $0xe4] sm:$0xf]
    %v129 = vld [vmem:[#allocation5 + $0xe8] sm:$0xf]
    %v130 = vld [vmem:[#allocation5 + $0xec] sm:$0xf]
    %v131 = vld [vmem:[#allocation5 + $0xf0] sm:$0xf]
    %v132 = vld [vmem:[#allocation5 + $0xf4] sm:$0xf]
    %v133 = vld [vmem:[#allocation5 + $0xf8] sm:$0xf]
    %v134 = vld [vmem:[#allocation5 + $0xfc] sm:$0xf]
    %v135 = vld [vmem:[#allocation5 + $0x100] sm:$0xf]
    %v136 = vld [vmem:[#allocation5 + $0x104] sm:$0xf]
    %v137 = vld [vmem:[#allocation5 + $0x108] sm:$0xf]
    %v138 = vld [vmem:[#allocation5 + $0x10c] sm:$0xf]
    %v139 = vld [vmem:[#allocation5 + $0x110] sm:$0xf]
    %v140 = vld [vmem:[#allocation5 + $0x114] sm:$0xf]
    %v141 = vld [vmem:[#allocation5 + $0x118] sm:$0xf]
    %v142 = vld [vmem:[#allocation5 + $0x11c] sm:$0xf]
    %v143 = vld [vmem:[#allocation5 + $0x120] sm:$0xf]
    %v144 = vld [vmem:[#allocation5 + $0x124] sm:$0xf]
    %v145 = vld [vmem:[#allocation5 + $0x128] sm:$0xf]
    %v146 = vld [vmem:[#allocation5 + $0x12c] sm:$0xf]
    %v147 = vld [vmem:[#allocation5 + $0x130] sm:$0xf]
    %v148 = vld [vmem:[#allocation5 + $0x134] sm:$0xf]
    %v149 = vld [vmem:[#allocation5 + $0x138] sm:$0xf]
    %v150 = vld [vmem:[#allocation5 + $0x13c] sm:$0xf]
    %v151 = vld [vmem:[#allocation5 + $0x140] sm:$0xf]
    %v152 = vld [vmem:[#allocation5 + $0x144] sm:$0xf]
    %v153 = vld [vmem:[#allocation5 + $0x148] sm:$0xf]
    %v154 = vld [vmem:[#allocation5 + $0x14c] sm:$0xf]
    %v155 = vld [vmem:[#allocation5 + $0x150] sm:$0xf]
    %v156 = vld [vmem:[#allocation5 + $0x154] sm:$0xf]
    %v157 = vld [vmem:[#allocation5 + $0x158] sm:$0xf]
    %v158 = vld [vmem:[#allocation5 + $0x15c] sm:$0xf]
    %v159 = vld [vmem:[#allocation5 + $0x160] sm:$0xf]
    %v160 = vld [vmem:[#allocation5 + $0x164] sm:$0xf]
    %v161 = vld [vmem:[#allocation5 + $0x168] sm:$0xf]
    %v162 = vld [vmem:[#allocation5 + $0x16c] sm:$0xf]
    %v163 = vld [vmem:[#allocation5 + $0x170] sm:$0xf]
    %v164 = vld [vmem:[#allocation5 + $0x174] sm:$0xf]
    %v165 = vld [vmem:[#allocation5 + $0x178] sm:$0xf]
    %v166 = vld [vmem:[#allocation5 + $0x17c] sm:$0xf]
    %v167 = vld [vmem:[#allocation5 + $0x180] sm:$0xf]
    %v168 = vld [vmem:[#allocation5 + $0x184] sm:$0xf]
    %v169 = vld [vmem:[#allocation5 + $0x188] sm:$0xf]
    %v170 = vld [vmem:[#allocation5 + $0x18c] sm:$0xf]
    %v171 = vld [vmem:[#allocation5 + $0x190] sm:$0xf]
    %v172 = vld [vmem:[#allocation5 + $0x194] sm:$0xf]
    %v173 = vld [vmem:[#allocation5 + $0x198] sm:$0xf]
    %v174 = vld [vmem:[#allocation5 + $0x19c] sm:$0xf]
    %v175 = vld [vmem:[#allocation5 + $0x1a0] sm:$0xf]
    %v176 = vld [vmem:[#allocation5 + $0x1a4] sm:$0xf]
    %v177 = vld [vmem:[#allocation5 + $0x1a8] sm:$0xf]
    %v178 = vld [vmem:[#allocation5 + $0x1ac] sm:$0xf]
    %v179 = vld [vmem:[#allocation5 + $0x1b0] sm:$0xf]
    %v180 = vld [vmem:[#allocation5 + $0x1b4] sm:$0xf]
    %v181 = vld [vmem:[#allocation5 + $0x1b8] sm:$0xf]
    %v182 = vld [vmem:[#allocation5 + $0x1bc] sm:$0xf]
    %v183 = vld [vmem:[#allocation5 + $0x1c0] sm:$0xf]
    %v184 = vld [vmem:[#allocation5 + $0x1c4] sm:$0xf]
    %v185 = vld [vmem:[#allocation5 + $0x1c8] sm:$0xf]
    %v186 = vld [vmem:[#allocation5 + $0x1cc] sm:$0xf]
    %v187 = vld [vmem:[#allocation5 + $0x1d0] sm:$0xf]
    %v188 = vld [vmem:[#allocation5 + $0x1d4] sm:$0xf]
    %v189 = vld [vmem:[#allocation5 + $0x1d8] sm:$0xf]
    %v190 = vld [vmem:[#allocation5 + $0x1dc] sm:$0xf]
    %v191 = vld [vmem:[#allocation5 + $0x1e0] sm:$0xf]
    %v192 = vld [vmem:[#allocation5 + $0x1e4] sm:$0xf]
    %v193 = vld [vmem:[#allocation5 + $0x1e8] sm:$0xf]
    %v194 = vld [vmem:[#allocation5 + $0x1ec] sm:$0xf]
    %v195 = vld [vmem:[#allocation5 + $0x1f0] sm:$0xf]
    %v196 = vld [vmem:[#allocation5 + $0x1f4] sm:$0xf]
    %v197 = vld [vmem:[#allocation5 + $0x1f8] sm:$0xf]
    %v198 = vld [vmem:[#allocation5 + $0x1fc] sm:$0xf]
    %v327 = vunpack.c.l.b16 %v71
    %v328 = vunpack.c.l.b16 %v72
    %v329 = vunpack.c.l.b16 %v73
    %v330 = vunpack.c.l.b16 %v74
    %v331 = vunpack.c.l.b16 %v75
    %v332 = vunpack.c.l.b16 %v76
    %v333 = vunpack.c.l.b16 %v77
    %v334 = vunpack.c.l.b16 %v78
    %v335 = vunpack.c.l.b16 %v79
    %v336 = vunpack.c.l.b16 %v80
    %v337 = vunpack.c.l.b16 %v81
    %v338 = vunpack.c.l.b16 %v82
    %v339 = vunpack.c.l.b16 %v83
    %v340 = vunpack.c.l.b16 %v84
    %v341 = vunpack.c.l.b16 %v85
    %v342 = vunpack.c.l.b16 %v86
    %v343 = vunpack.c.l.b16 %v87
    %v344 = vunpack.c.l.b16 %v88
    %v345 = vunpack.c.l.b16 %v89
    %v346 = vunpack.c.l.b16 %v90
    %v347 = vunpack.c.l.b16 %v91
    %v348 = vunpack.c.l.b16 %v92
    %v349 = vunpack.c.l.b16 %v93
    %v350 = vunpack.c.l.b16 %v94
    %v351 = vunpack.c.l.b16 %v95
    %v352 = vunpack.c.l.b16 %v96
    %v353 = vunpack.c.l.b16 %v97
    %v354 = vunpack.c.l.b16 %v98
    %v355 = vunpack.c.l.b16 %v99
    %v356 = vunpack.c.l.b16 %v100
    %v357 = vunpack.c.l.b16 %v101
    %v358 = vunpack.c.l.b16 %v102
    %v359 = vunpack.c.l.b16 %v103
    %v360 = vunpack.c.l.b16 %v104
    %v361 = vunpack.c.l.b16 %v105
    %v362 = vunpack.c.l.b16 %v106
    %v363 = vunpack.c.l.b16 %v107
    %v364 = vunpack.c.l.b16 %v108
    %v365 = vunpack.c.l.b16 %v109
    %v366 = vunpack.c.l.b16 %v110
    %v367 = vunpack.c.l.b16 %v111
    %v368 = vunpack.c.l.b16 %v112
    %v369 = vunpack.c.l.b16 %v113
    %v370 = vunpack.c.l.b16 %v114
    %v371 = vunpack.c.l.b16 %v115
    %v372 = vunpack.c.l.b16 %v116
    %v373 = vunpack.c.l.b16 %v117
    %v374 = vunpack.c.l.b16 %v118
    %v375 = vunpack.c.l.b16 %v119
    %v376 = vunpack.c.l.b16 %v120
    %v377 = vunpack.c.l.b16 %v121
    %v378 = vunpack.c.l.b16 %v122
    %v379 = vunpack.c.l.b16 %v123
    %v380 = vunpack.c.l.b16 %v124
    %v381 = vunpack.c.l.b16 %v125
    %v382 = vunpack.c.l.b16 %v126
    %v383 = vunpack.c.l.b16 %v127
    %v384 = vunpack.c.l.b16 %v128
    %v385 = vunpack.c.l.b16 %v129
    %v386 = vunpack.c.l.b16 %v130
    %v387 = vunpack.c.l.b16 %v131
    %v388 = vunpack.c.l.b16 %v132
    %v389 = vunpack.c.l.b16 %v133
    %v390 = vunpack.c.l.b16 %v134
    %v391 = vunpack.c.l.b16 %v135
    %v392 = vunpack.c.l.b16 %v136
    %v393 = vunpack.c.l.b16 %v137
    %v394 = vunpack.c.l.b16 %v138
    %v395 = vunpack.c.l.b16 %v139
    %v396 = vunpack.c.l.b16 %v140
    %v397 = vunpack.c.l.b16 %v141
    %v398 = vunpack.c.l.b16 %v142
    %v399 = vunpack.c.l.b16 %v143
    %v400 = vunpack.c.l.b16 %v144
    %v401 = vunpack.c.l.b16 %v145
    %v402 = vunpack.c.l.b16 %v146
    %v403 = vunpack.c.l.b16 %v147
    %v404 = vunpack.c.l.b16 %v148
    %v405 = vunpack.c.l.b16 %v149
    %v406 = vunpack.c.l.b16 %v150
    %v407 = vunpack.c.l.b16 %v151
    %v408 = vunpack.c.l.b16 %v152
    %v409 = vunpack.c.l.b16 %v153
    %v410 = vunpack.c.l.b16 %v154
    %v411 = vunpack.c.l.b16 %v155
    %v412 = vunpack.c.l.b16 %v156
    %v413 = vunpack.c.l.b16 %v157
    %v414 = vunpack.c.l.b16 %v158
    %v415 = vunpack.c.l.b16 %v159
    %v416 = vunpack.c.l.b16 %v160
    %v417 = vunpack.c.l.b16 %v161
    %v418 = vunpack.c.l.b16 %v162
    %v419 = vunpack.c.l.b16 %v163
    %v420 = vunpack.c.l.b16 %v164
    %v421 = vunpack.c.l.b16 %v165
    %v422 = vunpack.c.l.b16 %v166
    %v423 = vunpack.c.l.b16 %v167
    %v424 = vunpack.c.l.b16 %v168
    %v425 = vunpack.c.l.b16 %v169
    %v426 = vunpack.c.l.b16 %v170
    %v427 = vunpack.c.l.b16 %v171
    %v428 = vunpack.c.l.b16 %v172
    %v429 = vunpack.c.l.b16 %v173
    %v430 = vunpack.c.l.b16 %v174
    %v431 = vunpack.c.l.b16 %v175
    %v432 = vunpack.c.l.b16 %v176
    %v433 = vunpack.c.l.b16 %v177
    %v434 = vunpack.c.l.b16 %v178
    %v435 = vunpack.c.l.b16 %v179
    %v436 = vunpack.c.l.b16 %v180
    %v437 = vunpack.c.l.b16 %v181
    %v438 = vunpack.c.l.b16 %v182
    %v439 = vunpack.c.l.b16 %v183
    %v440 = vunpack.c.l.b16 %v184
    %v441 = vunpack.c.l.b16 %v185
    %v442 = vunpack.c.l.b16 %v186
    %v443 = vunpack.c.l.b16 %v187
    %v444 = vunpack.c.l.b16 %v188
    %v445 = vunpack.c.l.b16 %v189
    %v446 = vunpack.c.l.b16 %v190
    %v447 = vunpack.c.l.b16 %v191
    %v448 = vunpack.c.l.b16 %v192
    %v449 = vunpack.c.l.b16 %v193
    %v450 = vunpack.c.l.b16 %v194
    %v451 = vunpack.c.l.b16 %v195
    %v452 = vunpack.c.l.b16 %v196
    %v453 = vunpack.c.l.b16 %v197
    %v454 = vunpack.c.l.b16 %v198
    %v455 = vpack.c.b16 %v328, %v327
    %v456 = vpack.c.b16 %v330, %v329
    %v457 = vpack.c.b16 %v332, %v331
    %v458 = vpack.c.b16 %v334, %v333
    %v459 = vpack.c.b16 %v336, %v335
    %v460 = vpack.c.b16 %v338, %v337
    %v461 = vpack.c.b16 %v340, %v339
    %v462 = vpack.c.b16 %v342, %v341
    %v463 = vpack.c.b16 %v344, %v343
    %v464 = vpack.c.b16 %v346, %v345
    %v465 = vpack.c.b16 %v348, %v347
    %v466 = vpack.c.b16 %v350, %v349
    %v467 = vpack.c.b16 %v352, %v351
    %v468 = vpack.c.b16 %v354, %v353
    %v469 = vpack.c.b16 %v356, %v355
    %v470 = vpack.c.b16 %v358, %v357
    %v471 = vpack.c.b16 %v360, %v359
    %v472 = vpack.c.b16 %v362, %v361
    %v473 = vpack.c.b16 %v364, %v363
    %v474 = vpack.c.b16 %v366, %v365
    %v475 = vpack.c.b16 %v368, %v367
    %v476 = vpack.c.b16 %v370, %v369
    %v477 = vpack.c.b16 %v372, %v371
    %v478 = vpack.c.b16 %v374, %v373
    %v479 = vpack.c.b16 %v376, %v375
    %v480 = vpack.c.b16 %v378, %v377
    %v481 = vpack.c.b16 %v380, %v379
    %v482 = vpack.c.b16 %v382, %v381
    %v483 = vpack.c.b16 %v384, %v383
    %v484 = vpack.c.b16 %v386, %v385
    %v485 = vpack.c.b16 %v388, %v387
    %v486 = vpack.c.b16 %v390, %v389
    %v487 = vpack.c.b16 %v392, %v391
    %v488 = vpack.c.b16 %v394, %v393
    %v489 = vpack.c.b16 %v396, %v395
    %v490 = vpack.c.b16 %v398, %v397
    %v491 = vpack.c.b16 %v400, %v399
    %v492 = vpack.c.b16 %v402, %v401
    %v493 = vpack.c.b16 %v404, %v403
    %v494 = vpack.c.b16 %v406, %v405
    %v495 = vpack.c.b16 %v408, %v407
    %v496 = vpack.c.b16 %v410, %v409
    %v497 = vpack.c.b16 %v412, %v411
    %v498 = vpack.c.b16 %v414, %v413
    %v499 = vpack.c.b16 %v416, %v415
    %v500 = vpack.c.b16 %v418, %v417
    %v501 = vpack.c.b16 %v420, %v419
    %v502 = vpack.c.b16 %v422, %v421
    %v503 = vpack.c.b16 %v424, %v423
    %v504 = vpack.c.b16 %v426, %v425
    %v505 = vpack.c.b16 %v428, %v427
    %v506 = vpack.c.b16 %v430, %v429
    %v507 = vpack.c.b16 %v432, %v431
    %v508 = vpack.c.b16 %v434, %v433
    %v509 = vpack.c.b16 %v436, %v435
    %v510 = vpack.c.b16 %v438, %v437
    %v511 = vpack.c.b16 %v440, %v439
    %v512 = vpack.c.b16 %v442, %v441
    %v513 = vpack.c.b16 %v444, %v443
    %v514 = vpack.c.b16 %v446, %v445
    %v515 = vpack.c.b16 %v448, %v447
    %v516 = vpack.c.b16 %v450, %v449
    %v517 = vpack.c.b16 %v452, %v451
    %v518 = vpack.c.b16 %v454, %v453
    %583 = vmatpush.bf16.msra.mxu0 %v462
    %584 = vmatpush.bf16.msra.mxu0 %v461
    %585 = vmatpush.bf16.msra.mxu0 %v460
    %586 = vmatpush.bf16.msra.mxu0 %v459
    %587 = vmatpush.bf16.msra.mxu0 %v458
    %588 = vmatpush.bf16.msra.mxu0 %v457
    %589 = vmatpush.bf16.msra.mxu0 %v456
    %590 = vmatpush.bf16.msra.mxu0 %v455
    %591 = vmatmul.bf16.gmra.mxu0 %v63
    %v592 = vpop.f32.mrf.mxu0
    %v593 = vadd.f32 0.0, %v592
    %v594 = vpop.f32.mrf.mxu0
    %595 = vdwg.mxu0
    %596 = vmatpush.bf16.msra.mxu0 %v470
    %597 = vmatpush.bf16.msra.mxu0 %v469
    %598 = vmatpush.bf16.msra.mxu0 %v468
    %599 = vmatpush.bf16.msra.mxu0 %v467
    %600 = vmatpush.bf16.msra.mxu0 %v466
    %601 = vmatpush.bf16.msra.mxu0 %v465
    %602 = vmatpush.bf16.msra.mxu0 %v464
    %603 = vmatpush.bf16.msra.mxu0 %v463
    %604 = vmatmul.bf16.gmra.mxu0 %v64
    %v605 = vpop.f32.mrf.mxu0
    %v606 = vadd.f32 %v593, %v605
    %v607 = vpop.f32.mrf.mxu0
    %608 = vdwg.mxu0
    %609 = vmatpush.bf16.msra.mxu0 %v478
    %610 = vmatpush.bf16.msra.mxu0 %v477
    %611 = vmatpush.bf16.msra.mxu0 %v476
    %612 = vmatpush.bf16.msra.mxu0 %v475
    %613 = vmatpush.bf16.msra.mxu0 %v474
    %614 = vmatpush.bf16.msra.mxu0 %v473
    %615 = vmatpush.bf16.msra.mxu0 %v472
    %616 = vmatpush.bf16.msra.mxu0 %v471
    %617 = vmatmul.bf16.gmra.mxu0 %v65
    %v618 = vpop.f32.mrf.mxu0
    %v619 = vadd.f32 %v606, %v618
    %v620 = vpop.f32.mrf.mxu0
    %621 = vdwg.mxu0
    %622 = vmatpush.bf16.msra.mxu0 %v486
    %623 = vmatpush.bf16.msra.mxu0 %v485
    %624 = vmatpush.bf16.msra.mxu0 %v484
    %625 = vmatpush.bf16.msra.mxu0 %v483
    %626 = vmatpush.bf16.msra.mxu0 %v482
    %627 = vmatpush.bf16.msra.mxu0 %v481
    %628 = vmatpush.bf16.msra.mxu0 %v480
    %629 = vmatpush.bf16.msra.mxu0 %v479
    %630 = vmatmul.bf16.gmra.mxu0 %v66
    %v631 = vpop.f32.mrf.mxu0
    %v632 = vadd.f32 %v619, %v631
    %v633 = vpop.f32.mrf.mxu0
    %634 = vdwg.mxu0
    %635 = vmatpush.bf16.msra.mxu0 %v494
    %636 = vmatpush.bf16.msra.mxu0 %v493
    %637 = vmatpush.bf16.msra.mxu0 %v492
    %638 = vmatpush.bf16.msra.mxu0 %v491
    %639 = vmatpush.bf16.msra.mxu0 %v490
    %640 = vmatpush.bf16.msra.mxu0 %v489
    %641 = vmatpush.bf16.msra.mxu0 %v488
    %642 = vmatpush.bf16.msra.mxu0 %v487
    %643 = vmatmul.bf16.gmra.mxu0 %v67
    %v644 = vpop.f32.mrf.mxu0
    %v645 = vadd.f32 %v632, %v644
    %v646 = vpop.f32.mrf.mxu0
    %647 = vdwg.mxu0
    %648 = vmatpush.bf16.msra.mxu0 %v502
    %649 = vmatpush.bf16.msra.mxu0 %v501
    %650 = vmatpush.bf16.msra.mxu0 %v500
    %651 = vmatpush.bf16.msra.mxu0 %v499
    %652 = vmatpush.bf16.msra.mxu0 %v498
    %653 = vmatpush.bf16.msra.mxu0 %v497
    %654 = vmatpush.bf16.msra.mxu0 %v496
    %655 = vmatpush.bf16.msra.mxu0 %v495
    %656 = vmatmul.bf16.gmra.mxu0 %v68
    %v657 = vpop.f32.mrf.mxu0
    %v658 = vadd.f32 %v645, %v657
    %v659 = vpop.f32.mrf.mxu0
    %660 = vdwg.mxu0
    %661 = vmatpush.bf16.msra.mxu0 %v510
    %662 = vmatpush.bf16.msra.mxu0 %v509
    %663 = vmatpush.bf16.msra.mxu0 %v508
    %664 = vmatpush.bf16.msra.mxu0 %v507
    %665 = vmatpush.bf16.msra.mxu0 %v506
    %666 = vmatpush.bf16.msra.mxu0 %v505
    %667 = vmatpush.bf16.msra.mxu0 %v504
    %668 = vmatpush.bf16.msra.mxu0 %v503
    %669 = vmatmul.bf16.gmra.mxu0 %v69
    %v670 = vpop.f32.mrf.mxu0
    %v671 = vadd.f32 %v658, %v670
    %v672 = vpop.f32.mrf.mxu0
    %673 = vdwg.mxu0
    %674 = vmatpush.bf16.msra.mxu0 %v518
    %675 = vmatpush.bf16.msra.mxu0 %v517
    %676 = vmatpush.bf16.msra.mxu0 %v516
    %677 = vmatpush.bf16.msra.mxu0 %v515
    %678 = vmatpush.bf16.msra.mxu0 %v514
    %679 = vmatpush.bf16.msra.mxu0 %v513
    %680 = vmatpush.bf16.msra.mxu0 %v512
    %681 = vmatpush.bf16.msra.mxu0 %v511
    %682 = vmatmul.bf16.gmra.mxu0 %v70
    %v683 = vpop.f32.mrf.mxu0
    %v684 = vadd.f32 %v671, %v683
    %v685 = vpop.f32.mrf.mxu0
    %686 = vdwg.mxu0
    %v687 = vcvt.f32.s32.to.zero.pseudo %v684
    %688 = vst [vmem:[#allocation7] sm:$0x1] %v687
    // Predicated region
    $region18: #{tpu_custom_call.1} parent=1 // pred_check
      _
    $region19: #{tpu_custom_call.1} parent=1 // pred_check_branch
      %690 = sbr.rel (0) target = $region21
    $region20: #{tpu_custom_call.1} parent=1 // pred_region
      %692 = vsyncadd [#allocation4], 0
      %s694 = sshll.u32 [#allocation7], 4
      %s695 = int_to_ptr.vmem [resolvable:$true] %s694
      %s696 = sshll.u32 %s2, 4
      %s697 = int_to_ptr.hbm [resolvable:$true] %s696
      %699 = dma.vmem_to_hbm [thread:$0]  %s695, 16, %s697, [#allocation4]
    $region21: #{tpu_custom_call.1} parent=1 // pred_fallthru
      _
    // Predicated region
    $region22: #{tpu_custom_call.1} parent=1 // pred_check
      _
    $region23: #{tpu_custom_call.1} parent=1 // pred_check_branch
      %701 = sbr.rel (0) target = $region25
    $region24: #{tpu_custom_call.1} parent=1 // pred_region
      %703 = dma.done [#allocation4], 16
    $region25: #{tpu_custom_call.1} parent=1 // pred_fallthru
      _
    %704 = vsyncpa [#allocation3], 1
    %705 = vsyncpa [#allocation6], 1
    %706 = vsyncpa [#allocation4], 1

</llo_original>
